<compile_context>
chip_gen: v6e
topology: v6e:2x2x1
jax: 0.10.0
libtpu: 0.0.40
codegen_flags: <defaults>
</compile_context>

<pallas_src>
import jax
import jax.numpy as jnp
from jax.experimental import pallas as pl
from jax.experimental.pallas import tpu as pltpu

_TRIM = 21


def _python_slice_stop(dim: int, stop: int) -> int:
    # Reproduce Python/PyTorch `[:stop]` semantics (handles negative stop).
    if stop < 0:
        stop = dim + stop
    return max(0, min(dim, stop))


def _round_up(a: int, m: int) -> int:
    return ((a + m - 1) // m) * m


# --------------------------------------------------------------------------
# Primary path: direct HBM -> HBM strided DMA (no VMEM staging, no vld/vst).
# --------------------------------------------------------------------------
def _make_trim_dma_kernel(cb: int, rem: int, n_full: int, ho: int, wo: int):
    def _copy_chunk(x_hbm, o_hbm, sem, i, c0, sz):
        # Keep two DMAs in flight per grid step (hides descriptor-issue
        # latency); all sub-chunk sizes are static Python ints.
        if sz >= 2:
            splits = ((0, sz // 2), (sz // 2, sz - sz // 2))
        else:
            splits = ((0, sz),)
        copies = []
        for k, (off, ln) in enumerate(splits):
            cp = pltpu.make_async_copy(
                # Source: only the kept window [0:ho, 0:wo] (trimmed border
                # is never read from HBM). Offsets are 0 => tile-aligned.
                x_hbm.at[pl.ds(i, 1), pl.ds(c0 + off, ln),
                         pl.ds(0, ho), pl.ds(0, wo)],
                # Destination: full trailing dims of the output.
                o_hbm.at[pl.ds(i, 1), pl.ds(c0 + off, ln)],
                sem.at[k],
            )
            cp.start()
            copies.append(cp)
        for cp in copies:
            cp.wait()

    def kernel(x_hbm, o_hbm, sem):
        i = pl.program_id(0)          # batch index
        j = pl.program_id(1)          # channel-chunk index
        if rem == 0:
            _copy_chunk(x_hbm, o_hbm, sem, i, j * cb, cb)
        else:
            @pl.when(j < n_full)
            def _():
                _copy_chunk(x_hbm, o_hbm, sem, i, j * cb, cb)

            @pl.when(j == n_full)
            def _():
                _copy_chunk(x_hbm, o_hbm, sem, i, n_full * cb, rem)

    return kernel


def _trim_dma(x: jax.Array, n: int, c: int, ho: int, wo: int) -> jax.Array:
    itemsize = jnp.dtype(x.dtype).itemsize
    bytes_per_channel = ho * wo * itemsize
    target_chunk_bytes = 16 << 20          # ~16 MiB per DMA step (amortizes
    cb = max(1, min(c, target_chunk_bytes // max(1, bytes_per_channel)))
    # v7x has 2 TensorCores: guarantee >=2 grid steps whenever possible.
    # (On single-TC v5e/v6e the extra step costs ~0.35 us — negligible.)
    if n * pl.cdiv(c, cb) < 2 and c >= 2:
        cb = pl.cdiv(c, 2)
    # TODO(synk): for n == 1 and c == 1 an H-tiling grid axis could feed the
    # second v7x core; skipped (rare) to keep the DMA descriptors simple.
    n_full, rem = divmod(c, cb)
    grid = (n, n_full + (1 if rem else 0))

    return pl.pallas_call(
        _make_trim_dma_kernel(cb, rem, n_full, ho, wo),
        out_shape=jax.ShapeDtypeStruct((n, c, ho, wo), x.dtype),
        grid=grid,
        in_specs=[pl.BlockSpec(memory_space=pl.ANY)],
        out_specs=pl.BlockSpec(memory_space=pl.ANY),
        scratch_shapes=[pltpu.SemaphoreType.DMA((2,))],
        compiler_params=pltpu.CompilerParams(
            dimension_semantics=("parallel", "parallel"),
        ),
        cost_estimate=pl.CostEstimate(
            flops=0,
            transcendentals=0,
            bytes_accessed=2 * n * c * ho * wo * itemsize,
        ),
    )(x)


# --------------------------------------------------------------------------
# Fallback path: VMEM-staged BlockSpec pipeline (previous proven kernel,
# improved with dtype-aware sublane grain + inner-run guard + cost estimate).
# --------------------------------------------------------------------------
def _trim_kernel_blockspec(x_ref, o_ref):
    ho = o_ref.shape[2]
    wo = o_ref.shape[3]
    o_ref[...] = x_ref[:, :, :ho, :wo]


def _trim_blockspec(x, n, c, h, w, ho, wo,
                    vmem_block_budget_bytes: int = 10 * 1024 * 1024):
    itemsize = jnp.dtype(x.dtype).itemsize
    # dtype-dependent sublane grain: 8 (f32), 16 (bf16), 32 (int8/fp8).
    sub_grain = max(8, 32 // itemsize)
    h_fetch = min(h, _round_up(ho, sub_grain))
    w_fetch = min(w, _round_up(wo, 128))
    if w_fetch * itemsize < 512:       # keep per-row DMA runs >= ~512 B
        w_fetch = w
    bytes_per_channel = (h_fetch * w_fetch + ho * wo) * itemsize
    cb = max(1, min(c, vmem_block_budget_bytes // max(1, bytes_per_channel)))
    if n * pl.cdiv(c, cb) < 2 and c >= 2:
        cb = pl.cdiv(c, 2)             # >=2 steps so both v7x cores work
    grid = (n, pl.cdiv(c, cb))

    return pl.pallas_call(
        _trim_kernel_blockspec,
        out_shape=jax.ShapeDtypeStruct((n, c, ho, wo), x.dtype),
        grid_spec=pltpu.PrefetchScalarGridSpec(
            num_scalar_prefetch=0,
            grid=grid,
            in_specs=[pl.BlockSpec((1, cb, h_fetch, w_fetch),
                                   lambda i, j: (i, j, 0, 0))],
            out_specs=pl.BlockSpec((1, cb, ho, wo),
                                   lambda i, j: (i, j, 0, 0)),
        ),
        compiler_params=pltpu.CompilerParams(
            dimension_semantics=("parallel", "parallel"),
            vmem_limit_bytes=32 * 1024 * 1024,   # safe on v5e/v6e/v7x
        ),
        cost_estimate=pl.CostEstimate(
            flops=0,
            transcendentals=0,
            bytes_accessed=n * c * (h_fetch * w_fetch + ho * wo) * itemsize,
        ),
    )(x)


# --------------------------------------------------------------------------
# Public entry point.
# --------------------------------------------------------------------------
def trim(x: jax.Array) -> jax.Array:
    """Equivalent of PyTorch Trim: x[:, :, :H-21, :W-21] for NCHW input."""
    n, c, h, w = x.shape
    ho = _python_slice_stop(h, h - _TRIM)
    wo = _python_slice_stop(w, w - _TRIM)

    # Degenerate / zero-size results: no kernel needed.
    if n == 0 or c == 0 or ho == 0 or wo == 0:
        return jnp.zeros((n, c, ho, wo), dtype=x.dtype)

    try:
        # Primary: DMA-engine copy, zero TensorCore / VMEM work.
        return _trim_dma(x, n, c, ho, wo)
    except Exception:
        # Robustness fallback (e.g. if a toolchain rejects the HBM->HBM
        # strided DMA): proven VMEM-staged BlockSpec copy.
        return _trim_blockspec(x, n, c, h, w, ho, wo)


if __name__ == "__main__":
    # Spatial must exceed 21 for a non-degenerate trim: 32x32 -> 11x11.
    key = jax.random.PRNGKey(0)
    x = jax.random.normal(key, (2, 4, 32, 32), dtype=jnp.float32)

    y = trim(x)
    jax.block_until_ready(y)

    # Reference check against plain slicing.
    y_ref = x[:, :, : x.shape[2] - 21, : x.shape[3] - 21]
    assert y.shape == y_ref.shape, (y.shape, y_ref.shape)
    assert jnp.array_equal(y, y_ref), "mismatch vs reference slice"

    print("KERNEL_OK")
</pallas_src>

<mosaic_0001>
module attributes {stable_mosaic.version = 11 : i64} {
  func.func @kernel(%arg0: i32, %arg1: i32, %arg2: memref<2x4x32x32xf32, #tpu.memory_space<any>>, %arg3: memref<2x4x11x11xf32, #tpu.memory_space<any>>, %arg4: memref<2x!tpu.dma_semaphore, #tpu.memory_space<semaphore_mem>>) attributes {dimension_semantics = [#tpu.dimension_semantics<parallel>, #tpu.dimension_semantics<parallel>], iteration_bounds = array<i64: 2, 1>, scalar_prefetch = 0 : i64, scratch_operands = 1 : i64, tpu.core_type = #tpu.core_type<tc>, window_params = [{}, {}]} {
    %c4_i32 = arith.constant 4 : i32
    %0 = arith.muli %arg1, %c4_i32 : i32
    %c0_i32 = arith.constant 0 : i32
    %1 = arith.addi %0, %c0_i32 : i32
    %c0_i32_0 = arith.constant 0 : i32
    %2 = arith.addi %0, %c0_i32_0 : i32
    %c0_i32_1 = arith.constant 0 : i32
    %c0_i32_2 = arith.constant 0 : i32
    %c0_i32_3 = arith.constant 0 : i32
    %3 = tpu.memref_slice %arg2[%arg0, %1, %c0_i32_2, %c0_i32_3] : memref<2x4x32x32xf32, #tpu.memory_space<any>> -> memref<1x2x11x11xf32, #tpu.memory_space<any>>
    %c0_i32_4 = arith.constant 0 : i32
    %c0_i32_5 = arith.constant 0 : i32
    %4 = tpu.memref_slice %arg3[%arg0, %2, %c0_i32_4, %c0_i32_5] : memref<2x4x11x11xf32, #tpu.memory_space<any>> -> memref<1x2x11x11xf32, #tpu.memory_space<any>>
    %5 = tpu.memref_slice %arg4[%c0_i32_1] : memref<2x!tpu.dma_semaphore, #tpu.memory_space<semaphore_mem>> -> memref<1x!tpu.dma_semaphore, #tpu.memory_space<semaphore_mem>>
    %6 = tpu.memref_squeeze %5 : memref<1x!tpu.dma_semaphore, #tpu.memory_space<semaphore_mem>> -> memref<!tpu.dma_semaphore, #tpu.memory_space<semaphore_mem>>
    tpu.enqueue_dma source(%3 : memref<1x2x11x11xf32, #tpu.memory_space<any>>) target(%4 : memref<1x2x11x11xf32, #tpu.memory_space<any>>) target_semaphore(%6 : memref<!tpu.dma_semaphore, #tpu.memory_space<semaphore_mem>>)
    %c2_i32 = arith.constant 2 : i32
    %7 = arith.addi %0, %c2_i32 : i32
    %c2_i32_6 = arith.constant 2 : i32
    %8 = arith.addi %0, %c2_i32_6 : i32
    %c1_i32 = arith.constant 1 : i32
    %c0_i32_7 = arith.constant 0 : i32
    %c0_i32_8 = arith.constant 0 : i32
    %9 = tpu.memref_slice %arg2[%arg0, %7, %c0_i32_7, %c0_i32_8] : memref<2x4x32x32xf32, #tpu.memory_space<any>> -> memref<1x2x11x11xf32, #tpu.memory_space<any>>
    %c0_i32_9 = arith.constant 0 : i32
    %c0_i32_10 = arith.constant 0 : i32
    %10 = tpu.memref_slice %arg3[%arg0, %8, %c0_i32_9, %c0_i32_10] : memref<2x4x11x11xf32, #tpu.memory_space<any>> -> memref<1x2x11x11xf32, #tpu.memory_space<any>>
    %11 = tpu.memref_slice %arg4[%c1_i32] : memref<2x!tpu.dma_semaphore, #tpu.memory_space<semaphore_mem>> -> memref<1x!tpu.dma_semaphore, #tpu.memory_space<semaphore_mem>>
    %12 = tpu.memref_squeeze %11 : memref<1x!tpu.dma_semaphore, #tpu.memory_space<semaphore_mem>> -> memref<!tpu.dma_semaphore, #tpu.memory_space<semaphore_mem>>
    tpu.enqueue_dma source(%9 : memref<1x2x11x11xf32, #tpu.memory_space<any>>) target(%10 : memref<1x2x11x11xf32, #tpu.memory_space<any>>) target_semaphore(%12 : memref<!tpu.dma_semaphore, #tpu.memory_space<semaphore_mem>>)
    %c0_i32_11 = arith.constant 0 : i32
    %c0_i32_12 = arith.constant 0 : i32
    %c0_i32_13 = arith.constant 0 : i32
    %13 = tpu.memref_slice %arg2[%arg0, %1, %c0_i32_12, %c0_i32_13] : memref<2x4x32x32xf32, #tpu.memory_space<any>> -> memref<1x2x11x11xf32, #tpu.memory_space<any>>
    %c0_i32_14 = arith.constant 0 : i32
    %c0_i32_15 = arith.constant 0 : i32
    %14 = tpu.memref_slice %arg3[%arg0, %2, %c0_i32_14, %c0_i32_15] : memref<2x4x11x11xf32, #tpu.memory_space<any>> -> memref<1x2x11x11xf32, #tpu.memory_space<any>>
    %15 = tpu.memref_slice %arg4[%c0_i32_11] : memref<2x!tpu.dma_semaphore, #tpu.memory_space<semaphore_mem>> -> memref<1x!tpu.dma_semaphore, #tpu.memory_space<semaphore_mem>>
    %16 = tpu.memref_squeeze %15 : memref<1x!tpu.dma_semaphore, #tpu.memory_space<semaphore_mem>> -> memref<!tpu.dma_semaphore, #tpu.memory_space<semaphore_mem>>
    tpu.wait_dma2 semaphore(%16 : memref<!tpu.dma_semaphore, #tpu.memory_space<semaphore_mem>>) src(%13 : memref<1x2x11x11xf32, #tpu.memory_space<any>>) dst(%14 : memref<1x2x11x11xf32, #tpu.memory_space<any>>)
    %c1_i32_16 = arith.constant 1 : i32
    %c0_i32_17 = arith.constant 0 : i32
    %c0_i32_18 = arith.constant 0 : i32
    %17 = tpu.memref_slice %arg2[%arg0, %7, %c0_i32_17, %c0_i32_18] : memref<2x4x32x32xf32, #tpu.memory_space<any>> -> memref<1x2x11x11xf32, #tpu.memory_space<any>>
    %c0_i32_19 = arith.constant 0 : i32
    %c0_i32_20 = arith.constant 0 : i32
    %18 = tpu.memref_slice %arg3[%arg0, %8, %c0_i32_19, %c0_i32_20] : memref<2x4x11x11xf32, #tpu.memory_space<any>> -> memref<1x2x11x11xf32, #tpu.memory_space<any>>
    %19 = tpu.memref_slice %arg4[%c1_i32_16] : memref<2x!tpu.dma_semaphore, #tpu.memory_space<semaphore_mem>> -> memref<1x!tpu.dma_semaphore, #tpu.memory_space<semaphore_mem>>
    %20 = tpu.memref_squeeze %19 : memref<1x!tpu.dma_semaphore, #tpu.memory_space<semaphore_mem>> -> memref<!tpu.dma_semaphore, #tpu.memory_space<semaphore_mem>>
    tpu.wait_dma2 semaphore(%20 : memref<!tpu.dma_semaphore, #tpu.memory_space<semaphore_mem>>) src(%17 : memref<1x2x11x11xf32, #tpu.memory_space<any>>) dst(%18 : memref<1x2x11x11xf32, #tpu.memory_space<any>>)
    return
  }
}

module attributes {stable_mosaic.version = 11 : i64} {
  func.func @_trim_kernel_blockspec(%arg0: i32, %arg1: i32, %arg2: memref<1x4x16x32xf32, #tpu.memory_space<vmem>>, %arg3: memref<1x4x11x11xf32, #tpu.memory_space<vmem>>) attributes {dimension_semantics = [#tpu.dimension_semantics<parallel>, #tpu.dimension_semantics<parallel>], iteration_bounds = array<i64: 2, 1>, scalar_prefetch = 0 : i64, scratch_operands = 0 : i64, tpu.core_type = #tpu.core_type<tc>, window_params = [{transform_indices = @transform_0, window_bounds = array<i64: 1, 4, 16, 32>}, {transform_indices = @transform_1, window_bounds = array<i64: 1, 4, 11, 11>}]} {
    %c0 = arith.constant 0 : index
    %c0_0 = arith.constant 0 : index
    %c0_1 = arith.constant 0 : index
    %c0_2 = arith.constant 0 : index
    %0 = vector.load %arg2[%c0, %c0_0, %c0_1, %c0_2] : memref<1x4x16x32xf32, #tpu.memory_space<vmem>>, vector<1x4x11x11xf32>
    %c0_3 = arith.constant 0 : index
    %c0_4 = arith.constant 0 : index
    %c0_5 = arith.constant 0 : index
    %c0_6 = arith.constant 0 : index
    %1 = vector.load %arg3[%c0_3, %c0_4, %c0_5, %c0_6] : memref<1x4x11x11xf32, #tpu.memory_space<vmem>>, vector<1x4x11x11xf32>
    tpu.vector_store %arg3[%c0_3, %c0_4, %c0_5, %c0_6], %0 {strides = array<i32>} : memref<1x4x11x11xf32, #tpu.memory_space<vmem>>, vector<1x4x11x11xf32>,
    return
  }
  func.func @transform_0(%arg0: i32, %arg1: i32) -> (i32, i32, i32, i32) {
    %c0_i32 = arith.constant 0 : i32
    %c0_i32_0 = arith.constant 0 : i32
    %c0_i32_1 = arith.constant 0 : i32
    return %arg0, %arg1, %c0_i32, %c0_i32_0 : i32, i32, i32, i32
  }
  func.func @transform_1(%arg0: i32, %arg1: i32) -> (i32, i32, i32, i32) {
    %c0_i32 = arith.constant 0 : i32
    %c0_i32_0 = arith.constant 0 : i32
    %c0_i32_1 = arith.constant 0 : i32
    return %arg0, %arg1, %c0_i32, %c0_i32_0 : i32, i32, i32, i32
  }
}

</mosaic_0001>

<llo_original>
// kernel: tpu_custom_call.1
$region0: #{tpu_custom_call.1}
  #allocation0 [shape = 'u32[]', space=smem, size = 0x4, offset = 0x4, fixed_abs, tag = 'smem constant byte address 0x4 - core index']
  #allocation1 [shape = 'u32[144,128]{1,0:T(1,128)}', space=vmem, size = 0x12000, scoped, tag = 'internal scratch']
  #allocation4 [shape = 's32[]', space=sflag, size = 0x4, offset = 0, fixed_abs, tag = 'sflag constant byte address 0x0 - dummy sync flag']
  %s0 = inlined_call_operand.hbm [shape: f32[2,4,32,32], index: 0, kind: input, shape index: {}]
  %s1 = inlined_call_operand.vmem [shape: f32[2,4,11,11], index: 1, kind: output, shape index: {}]
  %s2 = sld [smem:[#allocation0]]
  $region41: #{tpu_custom_call.1} parent=0
    _
  %s4 = ssub.s32 1, %s2
  %s5 = scalar_select 0, %s4, %s2
  $region1: #{tpu_custom_call.1} parent=0
    #allocation2 [shape = 'u8[65536]{0}', space=vmem, size = 0x10000, scoped, tag = 'input window, operand 0']
    #allocation3 [shape = 's32[2]{0}', space=sflag, size = 0x8, scoped, tag = 'scoped memory for tpu_custom_call.1']
    %6 = vsyncpa [#allocation3], 0
    %s7 = scalar_lea.sflag [#allocation3], 1
    %8 = vsyncpa %s7, 0
    loop: start=0, step=1, limit=4
    $region2: #{tpu_custom_call.1} parent=1 // loop_pre_header
      _
    $region3: #{tpu_custom_call.1} parent=1 // loop_header
      %s10 = sphi 0, %s14
      %p11 = scmp.ge.s32.totalorder %s10, 4
      %s17 = sphi 0, %s29
      %s18 = sphi 0, %s25
      %s19 = sphi 0, %s17
      %s20 = sphi 0, %s18
      %s21 = sphi 0, %s19
      %s22 = sphi 0, %s20
      %s34 = sphi 0, %s36
      %s37 = sphi 0, %s34
      %s38 = sphi 0, %s37
      %s54 = sphi 0, %s38
      %s62 = sphi 0, %s64
      %s65 = sphi 0, %s62
      %s66 = sphi 0, %s65
      %s82 = sphi 0, %s66
    $region4: #{tpu_custom_call.1} parent=1 // loop_header_branch
      %13 = sbr.rel (%p11) target = $region8
    $region5: #{tpu_custom_call.1} parent=1 // loop_body
      %s15 = ssub.s32 %s10, 1
      %s16 = ssub.s32 %s10, 2
      %s23 = sadd.s32 1, %s18
      %p24 = scmp.ge.s32.totalorder %s23, 1
      %s25 = scalar_select %p24, 0, %s23
      %s26 = sadd.s32 1, %s17
      %s27 = scalar_select %p24, %s26, %s17
      %p28 = scmp.ge.s32.totalorder %s27, 2
      %s29 = scalar_select %p28, 0, %s27
      %s30 = ssub.s32 %s17, %s29
      %s31 = ssub.s32 %s18, %s25
      %s32 = sor.u32 %s30, %s31
      %p33 = scmp.eq.s32.totalorder %s32, 0
      %s35 = sadd.s32 %s34, 1
      %s36 = scalar_select %p33, %s34, %s35
      %p39 = pneg %p33
      %p40 = scmp.eq.s32.totalorder %s10, 1
      %p41 = por %p39, %p40
      %p42 = scmp.ne.s32.totalorder %s34, %s37
      %p43 = scmp.eq.s32.totalorder %s10, 0
      %p44 = por %p42, %p43
      %p45 = scmp.ne.s32.totalorder %s34, %s37
      %p46 = scmp.eq.s32.totalorder %s15, 1
      %p47 = por %p45, %p46
      %p48 = scmp.ne.s32.totalorder %s37, %s38
      %p49 = scmp.eq.s32.totalorder %s15, 0
      %p50 = por %p48, %p49
      %p51 = scmp.ne.s32.totalorder %s37, %s38
      %p52 = scmp.eq.s32.totalorder %s16, 1
      %p53 = por %p51, %p52
      %p55 = scmp.ne.s32.totalorder %s38, %s54
      %p56 = scmp.eq.s32.totalorder %s16, 0
      %p57 = por %p55, %p56
      %s58 = ssub.s32 %s17, %s29
      %s59 = ssub.s32 %s18, %s25
      %s60 = sor.u32 %s58, %s59
      %p61 = scmp.eq.s32.totalorder %s60, 0
      %s63 = sadd.s32 %s62, 1
      %s64 = scalar_select %p61, %s62, %s63
      %p67 = pneg %p61
      %p68 = scmp.eq.s32.totalorder %s10, 1
      %p69 = por %p67, %p68
      %p70 = scmp.ne.s32.totalorder %s62, %s65
      %p71 = scmp.eq.s32.totalorder %s10, 0
      %p72 = por %p70, %p71
      %p73 = scmp.ne.s32.totalorder %s62, %s65
      %p74 = scmp.eq.s32.totalorder %s15, 1
      %p75 = por %p73, %p74
      %p76 = scmp.ne.s32.totalorder %s65, %s66
      %p77 = scmp.eq.s32.totalorder %s15, 0
      %p78 = por %p76, %p77
      %p79 = scmp.ne.s32.totalorder %s65, %s66
      %p80 = scmp.eq.s32.totalorder %s16, 1
      %p81 = por %p79, %p80
      %p83 = scmp.ne.s32.totalorder %s66, %s82
      %p84 = scmp.eq.s32.totalorder %s16, 0
      %p85 = por %p83, %p84
      %p86 = scmp.le.s32.totalorder 1, %s10
      %p87 = scmp.lt.s32.totalorder %s10, 3
      %p88 = pnand %p86, %p87
      %p89 = pneg %p88
      // Predicated region
      $region9: #{tpu_custom_call.1} parent=5 // pred_check
        _
      $region10: #{tpu_custom_call.1} parent=5 // pred_check_branch
        %91 = sbr.rel (%p88) target = $region12
      $region11: #{tpu_custom_call.1} parent=5 // pred_region
        %s92 = ssub.s32 %s10, 1
      $region12: #{tpu_custom_call.1} parent=5 // pred_fallthru
        _
      %p93 = scmp.lt.s32.totalorder %s10, 2
      // Predicated region
      $region13: #{tpu_custom_call.1} parent=5 // pred_check
        %p94 = pneg %p93
      $region14: #{tpu_custom_call.1} parent=5 // pred_check_branch
        %96 = sbr.rel (%p94) target = $region16
      $region15: #{tpu_custom_call.1} parent=5 // pred_region
        // Predicated region
        $region17: #{tpu_custom_call.1} parent=15 // pred_check
          %p97 = pneg %p44
        $region18: #{tpu_custom_call.1} parent=15 // pred_check_branch
          %99 = sbr.rel (%p97) target = $region20
        $region19: #{tpu_custom_call.1} parent=15 // pred_region
          #allocation5 [shape = 'u32[6]{0}', space=smem, size = 0x18, scoped, tag = 'DMA stride descriptor']
          %s100 = sand.u32 %s34, 1
          %s101 = scalar_lea.sflag [#allocation3], %s100
          %s102 = sand.u32 %s34, 1
          %s103 = smul.addr %s102, 64
          %s104 = scalar_lea.vmem [#allocation2], %s103
          %s105 = smul.u32 4, %s18
          %s107 = ssub.s32 1024, 1024
          %108 = vsyncadd %s101, %s107
          %s109 = smul.addr %s105, 4
          %s110 = smul.addr %s17, 16
          %s111 = sadd.s32 %s109, %s110
          %s112 = smul.addr %s111, 128
          %s113 = scalar_lea.hbm %s0, %s112
          %s115 = sshll.u32 1, 14
          %s116 = sxor.u32 4294967295, %s115
          %s118 = sld [smem:[#allocation0]]
          %s119 = sadd.s32 2, %s118
          %s121 = sshll.u32 7, 26
          %s122 = sxor.u32 4294967295, %s121
          %s123 = sand.u32 0, %s122
          %s124 = sshll.u32 %s119, 26
          %s125 = sor.u32 %s123, %s124
          %s126 = sshll.u32 %s104, 4
          %s127 = int_to_ptr.vmem [resolvable:$true] %s126
          %133 = sst [smem:[#allocation5]] 512
          %s134 = scalar_lea.smem [#allocation5], 1
          %135 = sst [smem:[%s134]] 256
          %s136 = scalar_lea.smem [#allocation5], 2
          %137 = sst [smem:[%s136]] 2
          %s138 = scalar_lea.smem [#allocation5], 3
          %139 = sst [smem:[%s138]] 128
          %s140 = scalar_lea.smem [#allocation5], 4
          %141 = sst [smem:[%s140]] 128
          %s142 = scalar_lea.smem [#allocation5], 5
          %143 = sst [smem:[%s142]] 8
          %145 = dma.general %s113, 1024, %s127, %s101, 131072, [#allocation5], %s125, 0
        $region20: #{tpu_custom_call.1} parent=15 // pred_fallthru
          _
      $region16: #{tpu_custom_call.1} parent=5 // pred_fallthru
        _
      %p146 = scmp.le.s32.totalorder 1, %s10
      %p147 = scmp.lt.s32.totalorder %s10, 3
      %p148 = pnand %p146, %p147
      %p149 = pneg %p148
      // Predicated region
      $region21: #{tpu_custom_call.1} parent=5 // pred_check
        _
      $region22: #{tpu_custom_call.1} parent=5 // pred_check_branch
        %151 = sbr.rel (%p148) target = $region24
      $region23: #{tpu_custom_call.1} parent=5 // pred_region
        %s152 = ssub.s32 %s10, 1
        %s153 = sand.u32 %s37, 1
        %s154 = scalar_lea.sflag [#allocation3], %s153
        %s155 = sand.u32 %s37, 1
        %s156 = smul.addr %s155, 64
        %s157 = scalar_lea.vmem [#allocation2], %s156
        // Predicated region
        $region25: #{tpu_custom_call.1} parent=23 // pred_check
          %p158 = pneg %p50
        $region26: #{tpu_custom_call.1} parent=23 // pred_check_branch
          %160 = sbr.rel (%p158) target = $region28
        $region27: #{tpu_custom_call.1} parent=23 // pred_region
          %161 = dma.done %s154, 1024
        $region28: #{tpu_custom_call.1} parent=23 // pred_fallthru
          _
        %s162 = sand.u32 %s37, 1
        %s163 = scalar_lea.sflag [#allocation3], %s162
        %s164 = sand.u32 %s37, 1
        %s165 = smul.addr %s164, 64
        %s166 = scalar_lea.vmem [#allocation2], %s165
        %p167 = pneg %p50
        %p168 = pneg %p47
        %p169 = pneg %p78
        %p170 = pneg %p75
        %s171 = smul.u32 4, %s20
        %p172 = scmp.lt.s32.totalorder %s19, 1
        %s173 = scalar_select %p172, %s19, 1
        %p174 = scmp.lt.s32.totalorder %s171, 3
        %s175 = scalar_select %p174, %s171, 3
        %s176 = smul.addr %s175, 2
        %s177 = smul.addr %s173, 8
        %s178 = sadd.s32 %s176, %s177
        %s179 = smul.addr %s178, 8
        %s180 = scalar_lea.vmem %s1, %s179
        %s181 = smul.u32 4, %s20
        %s182 = smul.u32 4, %s20
        %p183 = scmp.lt.s32.totalorder %s19, 1
        %s184 = scalar_select %p183, %s19, 1
        %p185 = scmp.lt.s32.totalorder %s182, 3
        %s186 = scalar_select %p185, %s182, 3
        %s187 = smul.addr %s186, 2
        %s188 = smul.addr %s184, 8
        %s189 = sadd.s32 %s187, %s188
        %s190 = smul.addr %s189, 8
        %s191 = scalar_lea.vmem %s1, %s190
        %s192 = smul.u32 4, %s20
        %v193 = vld [vmem:[%s157] sm:$0xff]
        %v194 = vld [vmem:[%s157 + $0x8] sm:$0x7]
        %v195 = vld [vmem:[%s157 + $0x10] sm:$0xff]
        %v196 = vld [vmem:[%s157 + $0x18] sm:$0x7]
        %v197 = vld [vmem:[%s157 + $0x20] sm:$0xff]
        %v198 = vld [vmem:[%s157 + $0x28] sm:$0x7]
        %v199 = vld [vmem:[%s157 + $0x30] sm:$0xff]
        %v200 = vld [vmem:[%s157 + $0x38] sm:$0x7]
        %vm201 = vcmask 89088
        %202 = vst.msk [vmem:[%s191] sm:$0xff] %vm201, %v193
        %vm203 = vcmask 83968
        %204 = vst.msk [vmem:[%s191 + $0x8] sm:$0x7] %vm203, %v194
        %205 = vst.msk [vmem:[%s191 + $0x10] sm:$0xff] %vm201, %v195
        %206 = vst.msk [vmem:[%s191 + $0x18] sm:$0x7] %vm203, %v196
        %207 = vst.msk [vmem:[%s191 + $0x20] sm:$0xff] %vm201, %v197
        %208 = vst.msk [vmem:[%s191 + $0x28] sm:$0x7] %vm203, %v198
        %209 = vst.msk [vmem:[%s191 + $0x30] sm:$0xff] %vm201, %v199
        %210 = vst.msk [vmem:[%s191 + $0x38] sm:$0x7] %vm203, %v200
        %s211 = smul.u32 4, %s20
        %p212 = scmp.lt.s32.totalorder %s19, 1
        %s213 = scalar_select %p212, %s19, 1
        %p214 = scmp.lt.s32.totalorder %s211, 3
        %s215 = scalar_select %p214, %s211, 3
        %s216 = smul.addr %s215, 2
        %s217 = smul.addr %s213, 8
        %s218 = sadd.s32 %s216, %s217
        %s219 = smul.addr %s218, 8
        %s220 = scalar_lea.vmem %s1, %s219
        // Predicated region
        $region29: #{tpu_custom_call.1} parent=23 // pred_check
          %p221 = pneg %p75
        $region30: #{tpu_custom_call.1} parent=23 // pred_check_branch
          %223 = sbr.rel (%p221) target = $region32
        $region31: #{tpu_custom_call.1} parent=23 // pred_region
          %s224 = smul.u32 4, %s20
        $region32: #{tpu_custom_call.1} parent=23 // pred_fallthru
          _
      $region24: #{tpu_custom_call.1} parent=5 // pred_fallthru
        _
      %p225 = scmp.le.s32.totalorder 2, %s10
      // Predicated region
      $region33: #{tpu_custom_call.1} parent=5 // pred_check
        %p226 = pneg %p225
      $region34: #{tpu_custom_call.1} parent=5 // pred_check_branch
        %228 = sbr.rel (%p226) target = $region36
      $region35: #{tpu_custom_call.1} parent=5 // pred_region
        %s229 = ssub.s32 %s10, 2
        // Predicated region
        $region37: #{tpu_custom_call.1} parent=35 // pred_check
          %p230 = pneg %p81
        $region38: #{tpu_custom_call.1} parent=35 // pred_check_branch
          %232 = sbr.rel (%p230) target = $region40
        $region39: #{tpu_custom_call.1} parent=35 // pred_region
          %s233 = smul.u32 4, %s22
          %p234 = scmp.lt.s32.totalorder %s21, 1
          %s235 = scalar_select %p234, %s21, 1
          %p236 = scmp.lt.s32.totalorder %s233, 3
          %s237 = scalar_select %p236, %s233, 3
          %s238 = smul.addr %s237, 2
          %s239 = smul.addr %s235, 8
          %s240 = sadd.s32 %s238, %s239
          %s241 = smul.addr %s240, 8
          %s242 = scalar_lea.vmem %s1, %s241
        $region40: #{tpu_custom_call.1} parent=35 // pred_fallthru
          _
      $region36: #{tpu_custom_call.1} parent=5 // pred_fallthru
        _
    $region6: #{tpu_custom_call.1} parent=1 // loop_footer
      %s14 = sadd.s32 1, %s10
    $region7: #{tpu_custom_call.1} parent=1 // loop_footer_branch
      %9 = sbr.rel target = $region3
    $region8: #{tpu_custom_call.1} parent=1 // loop_exit
      _
    %243 = vsyncpa [#allocation3], 1
    %s244 = scalar_lea.sflag [#allocation3], 1
    %245 = vsyncpa %s244, 1

</llo_original>
